<compile_context>
chip_gen: v7x
topology: tpu7x:2x2x1
jax: 0.10.0
libtpu: 0.0.40
codegen_flags: <defaults>
</compile_context>

<pallas_src>
import numpy as np
import jax
import jax.numpy as jnp
from jax.experimental import pallas as pl
from jax.experimental.pallas import tpu as pltpu


def _round_up(x, m):
    return ((x + m - 1) // m) * m


def reprog_kernel(w_np_ref, img_ref, a_ref, b_ref, c_ref, o_ref):
    # w_np_ref : (1, Knp_p)     f32  W gathered at non-patch canvas positions (M == 1 there),
    #                                zero-padded to a 128 multiple (tanh(0) = 0 -> no effect)
    # img_ref  : (Bp, Kp_p)     f32  flattened image patch, batch padded to 16, K padded to 256
    # a_ref    : (Kp_p, NCp)    bf16 fused  wf[patch_rows]    @ wc   (classifier folded in)
    # b_ref    : (Knp_p, NCp)   bf16 fused  wf[nonpatch_rows] @ wc
    # c_ref    : (1, NCp)       f32  fused  bf @ wc + bc
    # o_ref    : (Bp, NCp)      f32
    p = jnp.tanh(w_np_ref[...])                                        # f32 on VPU/EUP (v5e-safe)
    base = jnp.dot(p.astype(jnp.bfloat16), b_ref[...],
                   preferred_element_type=jnp.float32) + c_ref[...]    # (1, NCp), batch-independent
    y = jnp.dot(img_ref[...].astype(jnp.bfloat16), a_ref[...],
                preferred_element_type=jnp.float32) + base             # (Bp, NCp)
    o_ref[...] = y


def prepare_reprog_params(W, wf, bf, wc, bc, *, input_size, patch_h, patch_w):
    """Once-per-weight-update preparation (inference-path algebraic fusion)."""
    C = W.shape[0]
    chw = C * input_size * input_size
    assert wf.shape[0] == chw
    n_cls = wc.shape[1]

    h_start = input_size // 2 - patch_h // 2
    w_start = input_size // 2 - patch_w // 2

    # Static patch / non-patch index sets in flattened (c, h, w) order.  Ascending
    # nonzero order over ~mask matches image.reshape(B, C*ph*pw) row-major flatten.
    mask = np.ones((C, input_size, input_size), dtype=bool)
    mask[:, h_start:h_start + patch_h, w_start:w_start + patch_w] = False
    flat_mask = mask.reshape(-1)
    nonpatch_idx = np.nonzero(flat_mask)[0]          # (chw - pflat,)
    patch_idx = np.nonzero(~flat_mask)[0]            # (pflat,)

    pflat = int(patch_idx.size)
    knp = int(nonpatch_idx.size)

    # Lane-dense padding (all MXU dims multiples of 128; padded rows/cols are zero).
    nc_pad = _round_up(n_cls, 128)                   # 100 -> 128
    kp_pad = _round_up(pflat, 128)                   # 192 -> 256
    knp_pad = _round_up(knp, 128)                    # 576 -> 640

    hp = jax.lax.Precision.HIGHEST
    # Fused weights computed once in f32, shipped bf16 (MXU accumulates in f32).
    a = jnp.dot(wf[patch_idx], wc, precision=hp)                       # (pflat, n_cls)
    b = jnp.dot(wf[nonpatch_idx], wc, precision=hp)                    # (knp,   n_cls)
    c = jnp.dot(bf[None, :], wc, precision=hp) + bc[None, :]           # (1,     n_cls)

    a_bf = jnp.pad(a, ((0, kp_pad - pflat), (0, nc_pad - n_cls))).astype(jnp.bfloat16)
    b_bf = jnp.pad(b, ((0, knp_pad - knp), (0, nc_pad - n_cls))).astype(jnp.bfloat16)
    c_pad = jnp.pad(c, ((0, 0), (0, nc_pad - n_cls))).astype(jnp.float32)

    w_np = jnp.pad(W.reshape(-1)[nonpatch_idx], (0, knp_pad - knp)).reshape(1, knp_pad)
    w_np = w_np.astype(jnp.float32)

    return dict(w_np=w_np, a=a_bf, b=b_bf, c=c_pad,
                pflat=pflat, kp_pad=kp_pad, knp_pad=knp_pad,
                n_cls=n_cls, nc_pad=nc_pad)


def reprogramming_forward(image, params):
    """image: (B, C, ph, pw) float32, NCHW. Returns (B, n_cls) float32."""
    B = image.shape[0]
    pflat = params["pflat"]
    kp_pad = params["kp_pad"]
    knp_pad = params["knp_pad"]
    nc_pad = params["nc_pad"]

    b_pad = _round_up(B, 16)     # bf16 packs 16 rows per sublane group

    img_flat = image.reshape(B, -1)
    assert img_flat.shape[1] == pflat
    img_flat = jnp.pad(img_flat, ((0, b_pad - B), (0, kp_pad - pflat))).astype(jnp.float32)

    vmem = pl.BlockSpec(memory_space=pltpu.MemorySpace.VMEM)

    flops = (2 * knp_pad * nc_pad                 # tanh(W_np) @ b  (batch-independent)
             + 2 * b_pad * kp_pad * nc_pad        # img @ a
             + 2 * b_pad * nc_pad)                # bias adds
    bytes_accessed = (params["w_np"].size * 4 + img_flat.size * 4
                      + params["a"].size * 2 + params["b"].size * 2
                      + params["c"].size * 4 + b_pad * nc_pad * 4)

    out = pl.pallas_call(
        reprog_kernel,
        out_shape=jax.ShapeDtypeStruct((b_pad, nc_pad), jnp.float32),
        in_specs=[vmem] * 5,
        out_specs=vmem,
        cost_estimate=pl.CostEstimate(flops=flops,
                                      transcendentals=knp_pad,
                                      bytes_accessed=bytes_accessed),
    )(params["w_np"], img_flat, params["a"], params["b"], params["c"])

    return out[:B, :params["n_cls"]]


if __name__ == "__main__":
    # Small shapes consistent with the module: input_size=16, patch=8, channel_out=3
    B = 2
    C = 3
    INPUT_SIZE = 16
    PATCH = 8
    N_FEAT = 1000   # pre_model output dim (ImageNet logits)
    N_CLS = 100     # new_layers: Linear(1000, 100)
    CHW = C * INPUT_SIZE * INPUT_SIZE  # 768

    key = jax.random.PRNGKey(0)
    k_img, k_W, k_wf, k_bf, k_wc, k_bc = jax.random.split(key, 6)

    image = jax.random.normal(k_img, (B, C, PATCH, PATCH), jnp.float32)

    # Reprogramming parameter: W = torch.randn(channel_out, input_size, input_size)
    W = jax.random.normal(k_W, (C, INPUT_SIZE, INPUT_SIZE), jnp.float32)

    # Synthetic stand-in for the frozen pretrained backbone (-> 1000 features).
    wf = jax.random.normal(k_wf, (CHW, N_FEAT), jnp.float32) * (1.0 / jnp.sqrt(CHW))
    bf = jax.random.normal(k_bf, (N_FEAT,), jnp.float32) * 0.01

    # new_layers = nn.Linear(1000, 100); stored (out,in) in torch, pass transposed.
    wc_t = jax.random.normal(k_wc, (N_CLS, N_FEAT), jnp.float32) * (1.0 / jnp.sqrt(N_FEAT))
    bc = jax.random.normal(k_bc, (N_CLS,), jnp.float32) * 0.01
    wc = wc_t.T  # (1000, 100)

    params = prepare_reprog_params(W, wf, bf, wc, bc,
                                   input_size=INPUT_SIZE, patch_h=PATCH, patch_w=PATCH)
    y = reprogramming_forward(image, params)
    jax.block_until_ready(y)
    assert y.shape == (B, N_CLS)

    hp = jax.lax.Precision.HIGHEST

    # ---- pure f32 reference of the module semantics (loose: kernel uses bf16 fused weights) ----
    h0 = INPUT_SIZE // 2 - PATCH // 2
    M_ref = jnp.ones((C, INPUT_SIZE, INPUT_SIZE)).at[:, h0:h0 + PATCH, h0:h0 + PATCH].set(0.0)
    X_ref = jnp.zeros((B, C, INPUT_SIZE, INPUT_SIZE)).at[:, :, h0:h0 + PATCH, h0:h0 + PATCH].set(image)
    x_adv = jnp.tanh(W * M_ref)[None] + X_ref
    feat_f32 = jnp.dot(x_adv.reshape(B, CHW), wf, precision=hp) + bf
    y_f32 = jnp.dot(feat_f32, wc, precision=hp) + bc
    assert jnp.allclose(y, y_f32, atol=5e-2, rtol=5e-2), "mismatch vs f32 module reference"

    # ---- bf16-fused-matched reference (tight check of the kernel itself) ----
    img_q = image.reshape(B, -1).astype(jnp.bfloat16).astype(jnp.float32)
    p_q = jnp.tanh(params["w_np"]).astype(jnp.bfloat16).astype(jnp.float32)
    y_tight = (jnp.dot(img_q, params["a"][:img_q.shape[1]].astype(jnp.float32), precision=hp)
               + jnp.dot(p_q, params["b"].astype(jnp.float32), precision=hp)
               + params["c"])[:, :N_CLS]
    assert jnp.allclose(y, y_tight, atol=1e-2, rtol=1e-2), "mismatch vs bf16-fused reference"

    print("KERNEL_OK")
</pallas_src>

<mosaic_0001>
module attributes {stable_mosaic.version = 11 : i64} {
  func.func @reprog_kernel(%arg0: memref<1x640xf32, #tpu.memory_space<vmem>>, %arg1: memref<16x256xf32, #tpu.memory_space<vmem>>, %arg2: memref<256x128xbf16, #tpu.memory_space<vmem>>, %arg3: memref<640x128xbf16, #tpu.memory_space<vmem>>, %arg4: memref<1x128xf32, #tpu.memory_space<vmem>>, %arg5: memref<16x128xf32, #tpu.memory_space<vmem>>) attributes {dimension_semantics = [], scalar_prefetch = 0 : i64, scratch_operands = 0 : i64, tpu.core_type = #tpu.core_type<tc>} {
    %c0 = arith.constant 0 : index
    %c0_0 = arith.constant 0 : index
    %0 = vector.load %arg0[%c0, %c0_0] : memref<1x640xf32, #tpu.memory_space<vmem>>, vector<1x640xf32>
    %1 = math.tanh %0 : vector<1x640xf32>
    %2 = arith.truncf %1 : vector<1x640xf32> to vector<1x640xbf16>
    %c0_1 = arith.constant 0 : index
    %c0_2 = arith.constant 0 : index
    %3 = vector.load %arg3[%c0_1, %c0_2] : memref<640x128xbf16, #tpu.memory_space<vmem>>, vector<640x128xbf16>
    %cst = arith.constant dense<0.000000e+00> : vector<1x128xf32>
    %4 = tpu.matmul %2, %3, %cst {dimension_numbers = #tpu.dot_dimension_numbers<[1], [0], [0], [1], [0, 0, 1, 1], [], []>} : vector<1x640xbf16>, vector<640x128xbf16>, vector<1x128xf32> -> vector<1x128xf32>
    %c0_3 = arith.constant 0 : index
    %c0_4 = arith.constant 0 : index
    %5 = vector.load %arg4[%c0_3, %c0_4] : memref<1x128xf32, #tpu.memory_space<vmem>>, vector<1x128xf32>
    %6 = arith.addf %4, %5 : vector<1x128xf32>
    %c0_5 = arith.constant 0 : index
    %c0_6 = arith.constant 0 : index
    %7 = vector.load %arg1[%c0_5, %c0_6] : memref<16x256xf32, #tpu.memory_space<vmem>>, vector<16x256xf32>
    %8 = arith.truncf %7 : vector<16x256xf32> to vector<16x256xbf16>
    %c0_7 = arith.constant 0 : index
    %c0_8 = arith.constant 0 : index
    %9 = vector.load %arg2[%c0_7, %c0_8] : memref<256x128xbf16, #tpu.memory_space<vmem>>, vector<256x128xbf16>
    %cst_9 = arith.constant dense<0.000000e+00> : vector<16x128xf32>
    %10 = tpu.matmul %8, %9, %cst_9 {dimension_numbers = #tpu.dot_dimension_numbers<[1], [0], [0], [1], [0, 0, 1, 1], [], []>} : vector<16x256xbf16>, vector<256x128xbf16>, vector<16x128xf32> -> vector<16x128xf32>
    %11 = vector.broadcast %6 : vector<1x128xf32> to vector<16x128xf32>
    %12 = arith.addf %10, %11 : vector<16x128xf32>
    %c0_10 = arith.constant 0 : index
    %c0_11 = arith.constant 0 : index
    %13 = vector.load %arg5[%c0_10, %c0_11] : memref<16x128xf32, #tpu.memory_space<vmem>>, vector<16x128xf32>
    tpu.vector_store %arg5[%c0_10, %c0_11], %12 {strides = array<i32>} : memref<16x128xf32, #tpu.memory_space<vmem>>, vector<16x128xf32>,
    return
  }
}

</mosaic_0001>

<llo_original>
// kernel: tpu_custom_call.1
$region0: #{tpu_custom_call.1}
  #allocation0 [shape = 'u32[]', space=smem, size = 0x4, offset = 0x4, fixed_abs, tag = 'smem constant byte address 0x4 - core index']
  #allocation1 [shape = 'u32[144,128]{1,0:T(1,128)}', space=vmem, size = 0x12000, scoped, tag = 'internal scratch']
  %s0 = inlined_call_operand.hbm [shape: f32[1,640], index: 0, kind: input, shape index: {}]
  %s1 = inlined_call_operand.hbm [shape: f32[16,256], index: 1, kind: input, shape index: {}]
  %s2 = inlined_call_operand.hbm [shape: bf16[256,128], index: 2, kind: input, shape index: {}]
  %s3 = inlined_call_operand.hbm [shape: bf16[640,128], index: 3, kind: input, shape index: {}]
  %s4 = inlined_call_operand.vmem [shape: f32[1,128], index: 4, kind: input, shape index: {}]
  %s5 = inlined_call_operand.hbm [shape: f32[16,128], index: 5, kind: output, shape index: {}]
  %s6 = sld [smem:[#allocation0]]
  $region46: #{tpu_custom_call.1} parent=0
    _
  %s8 = ssub.s32 1, %s6
  %s9 = scalar_select 0, %s8, %s6
  $region1: #{tpu_custom_call.1} parent=0
    #allocation2 [shape = 'u8[2560]{0}', space=vmem, size = 0xc00, scoped, tag = 'input window, operand 0, single buffered']
    #allocation3 [shape = 's32[1]{0}', space=sflag, size = 0x4, scoped, tag = 'scoped memory for tpu_custom_call.1']
    #allocation4 [shape = 's32[1]{0}', space=sflag, size = 0x4, scoped, tag = 'scoped memory for tpu_custom_call.1']
    #allocation5 [shape = 'u8[16384]{0}', space=vmem, size = 0x4000, scoped, tag = 'input window, operand 1, single buffered']
    #allocation6 [shape = 's32[1]{0}', space=sflag, size = 0x4, scoped, tag = 'scoped memory for tpu_custom_call.1']
    #allocation7 [shape = 'u8[65536]{0}', space=vmem, size = 0x10000, scoped, tag = 'input window, operand 2, single buffered']
    #allocation8 [shape = 'u8[163840]{0}', space=vmem, size = 0x28000, scoped, tag = 'input window, operand 3, single buffered']
    #allocation9 [shape = 's32[1]{0}', space=sflag, size = 0x4, scoped, tag = 'scoped memory for tpu_custom_call.1']
    #allocation10 [shape = 'u8[8192]{0}', space=vmem, size = 0x2000, scoped, tag = 'output window, operand 0, single buffered']
    %10 = vsyncpa [#allocation3], 0
    %11 = vsyncpa [#allocation6], 0
    %12 = vsyncpa [#allocation9], 0
    %13 = vsyncpa [#allocation4], 0
    // Predicated region
    $region2: #{tpu_custom_call.1} parent=1 // pred_check
      _
    $region3: #{tpu_custom_call.1} parent=1 // pred_check_branch
      %15 = sbr.rel (0) target = $region5
    $region4: #{tpu_custom_call.1} parent=1 // pred_region
      %s17 = ssub.s32 80, 80
      %18 = vsyncadd [#allocation3], %s17
      %s20 = sshll.u32 [#allocation2], 4
      %s21 = int_to_ptr.vmem [resolvable:$true] %s20
      %23 = dma.hbm_to_vmem [thread:$0]  %s0, 80, %s21, [#allocation3]
    $region5: #{tpu_custom_call.1} parent=1 // pred_fallthru
      _
    // Predicated region
    $region6: #{tpu_custom_call.1} parent=1 // pred_check
      _
    $region7: #{tpu_custom_call.1} parent=1 // pred_check_branch
      %25 = sbr.rel (0) target = $region9
    $region8: #{tpu_custom_call.1} parent=1 // pred_region
      %s27 = ssub.s32 512, 512
      %28 = vsyncadd [#allocation6], %s27
      %s29 = sshll.u32 [#allocation5], 4
      %s30 = int_to_ptr.vmem [resolvable:$true] %s29
      %35 = dma.hbm_to_vmem [thread:$0]  %s1, 512, %s30, [#allocation6], 256, 256, 16
    $region9: #{tpu_custom_call.1} parent=1 // pred_fallthru
      _
    // Predicated region
    $region10: #{tpu_custom_call.1} parent=1 // pred_check
      _
    $region11: #{tpu_custom_call.1} parent=1 // pred_check_branch
      %37 = sbr.rel (0) target = $region13
    $region12: #{tpu_custom_call.1} parent=1 // pred_region
      %s39 = ssub.s32 2048, 2048
      %40 = vsyncadd [#allocation6], %s39
      %s41 = sshll.u32 [#allocation7], 4
      %s42 = int_to_ptr.vmem [resolvable:$true] %s41
      %47 = dma.hbm_to_vmem [thread:$0]  %s2, 2048, %s42, [#allocation6], 64, 64, 4
    $region13: #{tpu_custom_call.1} parent=1 // pred_fallthru
      _
    // Predicated region
    $region14: #{tpu_custom_call.1} parent=1 // pred_check
      _
    $region15: #{tpu_custom_call.1} parent=1 // pred_check_branch
      %49 = sbr.rel (0) target = $region17
    $region16: #{tpu_custom_call.1} parent=1 // pred_region
      %s51 = ssub.s32 5120, 5120
      %52 = vsyncadd [#allocation9], %s51
      %s53 = sshll.u32 [#allocation8], 4
      %s54 = int_to_ptr.vmem [resolvable:$true] %s53
      %59 = dma.hbm_to_vmem [thread:$0]  %s3, 5120, %s54, [#allocation9], 64, 64, 4
    $region17: #{tpu_custom_call.1} parent=1 // pred_fallthru
      _
    // Predicated region
    $region18: #{tpu_custom_call.1} parent=1 // pred_check
      _
    $region19: #{tpu_custom_call.1} parent=1 // pred_check_branch
      %61 = sbr.rel (0) target = $region21
    $region20: #{tpu_custom_call.1} parent=1 // pred_region
      _
    $region21: #{tpu_custom_call.1} parent=1 // pred_fallthru
      _
    // Predicated region
    $region22: #{tpu_custom_call.1} parent=1 // pred_check
      _
    $region23: #{tpu_custom_call.1} parent=1 // pred_check_branch
      %63 = sbr.rel (0) target = $region25
    $region24: #{tpu_custom_call.1} parent=1 // pred_region
      %64 = dma.done [#allocation3], 80
    $region25: #{tpu_custom_call.1} parent=1 // pred_fallthru
      _
    // Predicated region
    $region26: #{tpu_custom_call.1} parent=1 // pred_check
      _
    $region27: #{tpu_custom_call.1} parent=1 // pred_check_branch
      %66 = sbr.rel (0) target = $region29
    $region28: #{tpu_custom_call.1} parent=1 // pred_region
      %67 = dma.done [#allocation6], 512
    $region29: #{tpu_custom_call.1} parent=1 // pred_fallthru
      _
    // Predicated region
    $region30: #{tpu_custom_call.1} parent=1 // pred_check
      _
    $region31: #{tpu_custom_call.1} parent=1 // pred_check_branch
      %69 = sbr.rel (0) target = $region33
    $region32: #{tpu_custom_call.1} parent=1 // pred_region
      %70 = dma.done [#allocation6], 2048
    $region33: #{tpu_custom_call.1} parent=1 // pred_fallthru
      _
    // Predicated region
    $region34: #{tpu_custom_call.1} parent=1 // pred_check
      _
    $region35: #{tpu_custom_call.1} parent=1 // pred_check_branch
      %72 = sbr.rel (0) target = $region37
    $region36: #{tpu_custom_call.1} parent=1 // pred_region
      %73 = dma.done [#allocation9], 5120
    $region37: #{tpu_custom_call.1} parent=1 // pred_fallthru
      _
    %v75 = vld [vmem:[#allocation2] sm:$0x1f]
    %v76 = vtanh.pop %v75
    %v78 = vlaneseq
    %v79 = vshrl.u32 %v78, 7
    %v80 = vsub.s32 0, %v79
    %v81 = vrot.slane %v76, %v80
    %v82 = vlaneseq
    %v83 = vshrl.u32 %v82, 7
    %v84 = vsub.s32 1, %v83
    %v85 = vrot.slane %v76, %v84
    %v86 = vlaneseq
    %v87 = vshrl.u32 %v86, 7
    %v88 = vsub.s32 2, %v87
    %v89 = vrot.slane %v76, %v88
    %v90 = vlaneseq
    %v91 = vshrl.u32 %v90, 7
    %v92 = vsub.s32 3, %v91
    %v93 = vrot.slane %v76, %v92
    %v94 = vlaneseq
    %v95 = vshrl.u32 %v94, 7
    %v96 = vsub.s32 4, %v95
    %v97 = vrot.slane %v76, %v96
    %v103 = vpack.c.bf16 %v81, %v81
    %v104 = vpack.c.bf16 %v85, %v85
    %v105 = vpack.c.bf16 %v89, %v89
    %v106 = vpack.c.bf16 %v93, %v93
    %v107 = vpack.c.bf16 %v97, %v97
    %v108 = vld [vmem:[#allocation8] sm:$0xf]
    %v109 = vld [vmem:[#allocation8 + $0x4] sm:$0xf]
    %v110 = vld [vmem:[#allocation8 + $0x8] sm:$0xf]
    %v111 = vld [vmem:[#allocation8 + $0xc] sm:$0xf]
    %v112 = vld [vmem:[#allocation8 + $0x10] sm:$0xf]
    %v113 = vld [vmem:[#allocation8 + $0x14] sm:$0xf]
    %v114 = vld [vmem:[#allocation8 + $0x18] sm:$0xf]
    %v115 = vld [vmem:[#allocation8 + $0x1c] sm:$0xf]
    %v116 = vld [vmem:[#allocation8 + $0x20] sm:$0xf]
    %v117 = vld [vmem:[#allocation8 + $0x24] sm:$0xf]
    %v118 = vld [vmem:[#allocation8 + $0x28] sm:$0xf]
    %v119 = vld [vmem:[#allocation8 + $0x2c] sm:$0xf]
    %v120 = vld [vmem:[#allocation8 + $0x30] sm:$0xf]
    %v121 = vld [vmem:[#allocation8 + $0x34] sm:$0xf]
    %v122 = vld [vmem:[#allocation8 + $0x38] sm:$0xf]
    %v123 = vld [vmem:[#allocation8 + $0x3c] sm:$0xf]
    %v124 = vld [vmem:[#allocation8 + $0x40] sm:$0xf]
    %v125 = vld [vmem:[#allocation8 + $0x44] sm:$0xf]
    %v126 = vld [vmem:[#allocation8 + $0x48] sm:$0xf]
    %v127 = vld [vmem:[#allocation8 + $0x4c] sm:$0xf]
    %v128 = vld [vmem:[#allocation8 + $0x50] sm:$0xf]
    %v129 = vld [vmem:[#allocation8 + $0x54] sm:$0xf]
    %v130 = vld [vmem:[#allocation8 + $0x58] sm:$0xf]
    %v131 = vld [vmem:[#allocation8 + $0x5c] sm:$0xf]
    %v132 = vld [vmem:[#allocation8 + $0x60] sm:$0xf]
    %v133 = vld [vmem:[#allocation8 + $0x64] sm:$0xf]
    %v134 = vld [vmem:[#allocation8 + $0x68] sm:$0xf]
    %v135 = vld [vmem:[#allocation8 + $0x6c] sm:$0xf]
    %v136 = vld [vmem:[#allocation8 + $0x70] sm:$0xf]
    %v137 = vld [vmem:[#allocation8 + $0x74] sm:$0xf]
    %v138 = vld [vmem:[#allocation8 + $0x78] sm:$0xf]
    %v139 = vld [vmem:[#allocation8 + $0x7c] sm:$0xf]
    %v140 = vld [vmem:[#allocation8 + $0x80] sm:$0xf]
    %v141 = vld [vmem:[#allocation8 + $0x84] sm:$0xf]
    %v142 = vld [vmem:[#allocation8 + $0x88] sm:$0xf]
    %v143 = vld [vmem:[#allocation8 + $0x8c] sm:$0xf]
    %v144 = vld [vmem:[#allocation8 + $0x90] sm:$0xf]
    %v145 = vld [vmem:[#allocation8 + $0x94] sm:$0xf]
    %v146 = vld [vmem:[#allocation8 + $0x98] sm:$0xf]
    %v147 = vld [vmem:[#allocation8 + $0x9c] sm:$0xf]
    %v148 = vld [vmem:[#allocation8 + $0xa0] sm:$0xf]
    %v149 = vld [vmem:[#allocation8 + $0xa4] sm:$0xf]
    %v150 = vld [vmem:[#allocation8 + $0xa8] sm:$0xf]
    %v151 = vld [vmem:[#allocation8 + $0xac] sm:$0xf]
    %v152 = vld [vmem:[#allocation8 + $0xb0] sm:$0xf]
    %v153 = vld [vmem:[#allocation8 + $0xb4] sm:$0xf]
    %v154 = vld [vmem:[#allocation8 + $0xb8] sm:$0xf]
    %v155 = vld [vmem:[#allocation8 + $0xbc] sm:$0xf]
    %v156 = vld [vmem:[#allocation8 + $0xc0] sm:$0xf]
    %v157 = vld [vmem:[#allocation8 + $0xc4] sm:$0xf]
    %v158 = vld [vmem:[#allocation8 + $0xc8] sm:$0xf]
    %v159 = vld [vmem:[#allocation8 + $0xcc] sm:$0xf]
    %v160 = vld [vmem:[#allocation8 + $0xd0] sm:$0xf]
    %v161 = vld [vmem:[#allocation8 + $0xd4] sm:$0xf]
    %v162 = vld [vmem:[#allocation8 + $0xd8] sm:$0xf]
    %v163 = vld [vmem:[#allocation8 + $0xdc] sm:$0xf]
    %v164 = vld [vmem:[#allocation8 + $0xe0] sm:$0xf]
    %v165 = vld [vmem:[#allocation8 + $0xe4] sm:$0xf]
    %v166 = vld [vmem:[#allocation8 + $0xe8] sm:$0xf]
    %v167 = vld [vmem:[#allocation8 + $0xec] sm:$0xf]
    %v168 = vld [vmem:[#allocation8 + $0xf0] sm:$0xf]
    %v169 = vld [vmem:[#allocation8 + $0xf4] sm:$0xf]
    %v170 = vld [vmem:[#allocation8 + $0xf8] sm:$0xf]
    %v171 = vld [vmem:[#allocation8 + $0xfc] sm:$0xf]
    %v172 = vld [vmem:[#allocation8 + $0x100] sm:$0xf]
    %v173 = vld [vmem:[#allocation8 + $0x104] sm:$0xf]
    %v174 = vld [vmem:[#allocation8 + $0x108] sm:$0xf]
    %v175 = vld [vmem:[#allocation8 + $0x10c] sm:$0xf]
    %v176 = vld [vmem:[#allocation8 + $0x110] sm:$0xf]
    %v177 = vld [vmem:[#allocation8 + $0x114] sm:$0xf]
    %v178 = vld [vmem:[#allocation8 + $0x118] sm:$0xf]
    %v179 = vld [vmem:[#allocation8 + $0x11c] sm:$0xf]
    %v180 = vld [vmem:[#allocation8 + $0x120] sm:$0xf]
    %v181 = vld [vmem:[#allocation8 + $0x124] sm:$0xf]
    %v182 = vld [vmem:[#allocation8 + $0x128] sm:$0xf]
    %v183 = vld [vmem:[#allocation8 + $0x12c] sm:$0xf]
    %v184 = vld [vmem:[#allocation8 + $0x130] sm:$0xf]
    %v185 = vld [vmem:[#allocation8 + $0x134] sm:$0xf]
    %v186 = vld [vmem:[#allocation8 + $0x138] sm:$0xf]
    %v187 = vld [vmem:[#allocation8 + $0x13c] sm:$0xf]
    %v188 = vld [vmem:[%s4] sm:$0x1]
    %v269 = vunpack.c.l.b16 %v108
    %v270 = vunpack.c.l.b16 %v109
    %v271 = vunpack.c.l.b16 %v110
    %v272 = vunpack.c.l.b16 %v111
    %v273 = vunpack.c.l.b16 %v112
    %v274 = vunpack.c.l.b16 %v113
    %v275 = vunpack.c.l.b16 %v114
    %v276 = vunpack.c.l.b16 %v115
    %v277 = vunpack.c.l.b16 %v116
    %v278 = vunpack.c.l.b16 %v117
    %v279 = vunpack.c.l.b16 %v118
    %v280 = vunpack.c.l.b16 %v119
    %v281 = vunpack.c.l.b16 %v120
    %v282 = vunpack.c.l.b16 %v121
    %v283 = vunpack.c.l.b16 %v122
    %v284 = vunpack.c.l.b16 %v123
    %v285 = vunpack.c.l.b16 %v124
    %v286 = vunpack.c.l.b16 %v125
    %v287 = vunpack.c.l.b16 %v126
    %v288 = vunpack.c.l.b16 %v127
    %v289 = vunpack.c.l.b16 %v128
    %v290 = vunpack.c.l.b16 %v129
    %v291 = vunpack.c.l.b16 %v130
    %v292 = vunpack.c.l.b16 %v131
    %v293 = vunpack.c.l.b16 %v132
    %v294 = vunpack.c.l.b16 %v133
    %v295 = vunpack.c.l.b16 %v134
    %v296 = vunpack.c.l.b16 %v135
    %v297 = vunpack.c.l.b16 %v136
    %v298 = vunpack.c.l.b16 %v137
    %v299 = vunpack.c.l.b16 %v138
    %v300 = vunpack.c.l.b16 %v139
    %v301 = vunpack.c.l.b16 %v140
    %v302 = vunpack.c.l.b16 %v141
    %v303 = vunpack.c.l.b16 %v142
    %v304 = vunpack.c.l.b16 %v143
    %v305 = vunpack.c.l.b16 %v144
    %v306 = vunpack.c.l.b16 %v145
    %v307 = vunpack.c.l.b16 %v146
    %v308 = vunpack.c.l.b16 %v147
    %v309 = vunpack.c.l.b16 %v148
    %v310 = vunpack.c.l.b16 %v149
    %v311 = vunpack.c.l.b16 %v150
    %v312 = vunpack.c.l.b16 %v151
    %v313 = vunpack.c.l.b16 %v152
    %v314 = vunpack.c.l.b16 %v153
    %v315 = vunpack.c.l.b16 %v154
    %v316 = vunpack.c.l.b16 %v155
    %v317 = vunpack.c.l.b16 %v156
    %v318 = vunpack.c.l.b16 %v157
    %v319 = vunpack.c.l.b16 %v158
    %v320 = vunpack.c.l.b16 %v159
    %v321 = vunpack.c.l.b16 %v160
    %v322 = vunpack.c.l.b16 %v161
    %v323 = vunpack.c.l.b16 %v162
    %v324 = vunpack.c.l.b16 %v163
    %v325 = vunpack.c.l.b16 %v164
    %v326 = vunpack.c.l.b16 %v165
    %v327 = vunpack.c.l.b16 %v166
    %v328 = vunpack.c.l.b16 %v167
    %v329 = vunpack.c.l.b16 %v168
    %v330 = vunpack.c.l.b16 %v169
    %v331 = vunpack.c.l.b16 %v170
    %v332 = vunpack.c.l.b16 %v171
    %v333 = vunpack.c.l.b16 %v172
    %v334 = vunpack.c.l.b16 %v173
    %v335 = vunpack.c.l.b16 %v174
    %v336 = vunpack.c.l.b16 %v175
    %v337 = vunpack.c.l.b16 %v176
    %v338 = vunpack.c.l.b16 %v177
    %v339 = vunpack.c.l.b16 %v178
    %v340 = vunpack.c.l.b16 %v179
    %v341 = vunpack.c.l.b16 %v180
    %v342 = vunpack.c.l.b16 %v181
    %v343 = vunpack.c.l.b16 %v182
    %v344 = vunpack.c.l.b16 %v183
    %v345 = vunpack.c.l.b16 %v184
    %v346 = vunpack.c.l.b16 %v185
    %v347 = vunpack.c.l.b16 %v186
    %v348 = vunpack.c.l.b16 %v187
    %v349 = vpack.c.b16 %v270, %v269
    %v350 = vpack.c.b16 %v272, %v271
    %v351 = vpack.c.b16 %v274, %v273
    %v352 = vpack.c.b16 %v276, %v275
    %v353 = vpack.c.b16 %v278, %v277
    %v354 = vpack.c.b16 %v280, %v279
    %v355 = vpack.c.b16 %v282, %v281
    %v356 = vpack.c.b16 %v284, %v283
    %v357 = vpack.c.b16 %v286, %v285
    %v358 = vpack.c.b16 %v288, %v287
    %v359 = vpack.c.b16 %v290, %v289
    %v360 = vpack.c.b16 %v292, %v291
    %v361 = vpack.c.b16 %v294, %v293
    %v362 = vpack.c.b16 %v296, %v295
    %v363 = vpack.c.b16 %v298, %v297
    %v364 = vpack.c.b16 %v300, %v299
    %v365 = vpack.c.b16 %v302, %v301
    %v366 = vpack.c.b16 %v304, %v303
    %v367 = vpack.c.b16 %v306, %v305
    %v368 = vpack.c.b16 %v308, %v307
    %v369 = vpack.c.b16 %v310, %v309
    %v370 = vpack.c.b16 %v312, %v311
    %v371 = vpack.c.b16 %v314, %v313
    %v372 = vpack.c.b16 %v316, %v315
    %v373 = vpack.c.b16 %v318, %v317
    %v374 = vpack.c.b16 %v320, %v319
    %v375 = vpack.c.b16 %v322, %v321
    %v376 = vpack.c.b16 %v324, %v323
    %v377 = vpack.c.b16 %v326, %v325
    %v378 = vpack.c.b16 %v328, %v327
    %v379 = vpack.c.b16 %v330, %v329
    %v380 = vpack.c.b16 %v332, %v331
    %v381 = vpack.c.b16 %v334, %v333
    %v382 = vpack.c.b16 %v336, %v335
    %v383 = vpack.c.b16 %v338, %v337
    %v384 = vpack.c.b16 %v340, %v339
    %v385 = vpack.c.b16 %v342, %v341
    %v386 = vpack.c.b16 %v344, %v343
    %v387 = vpack.c.b16 %v346, %v345
    %v388 = vpack.c.b16 %v348, %v347
    %429 = vmatprep.subr.bf16.mxu0 0
    %430 = vmatpush1.bf16.msra.mxu0 %v349
    %431 = vmatprep.subr.bf16.mxu0 0
    %432 = vmatpush1.bf16.msra.mxu0 %v350
    %433 = vmatprep.subr.bf16.mxu0 0
    %434 = vmatpush1.bf16.msra.mxu0 %v351
    %435 = vmatprep.subr.bf16.mxu0 0
    %436 = vmatpush1.bf16.msra.mxu0 %v352
    %437 = vmatprep.subr.bf16.mxu0 0
    %438 = vmatpush1.bf16.msra.mxu0 %v353
    %439 = vmatprep.subr.bf16.mxu0 0
    %440 = vmatpush1.bf16.msra.mxu0 %v354
    %441 = vmatprep.subr.bf16.mxu0 0
    %442 = vmatpush1.bf16.msra.mxu0 %v355
    %443 = vmatprep.subr.bf16.mxu0 0
    %444 = vmatpush1.bf16.msra.mxu0 %v356
    %445 = vmatprep.subr.bf16.mxu0 0
    %446 = vmatpush1.bf16.msra.mxu0 %v357
    %447 = vmatprep.subr.bf16.mxu0 0
    %448 = vmatpush1.bf16.msra.mxu0 %v358
    %449 = vmatprep.subr.bf16.mxu0 0
    %450 = vmatpush1.bf16.msra.mxu0 %v359
    %451 = vmatprep.subr.bf16.mxu0 0
    %452 = vmatpush1.bf16.msra.mxu0 %v360
    %453 = vmatprep.subr.bf16.mxu0 0
    %454 = vmatpush1.bf16.msra.mxu0 %v361
    %455 = vmatprep.subr.bf16.mxu0 0
    %456 = vmatpush1.bf16.msra.mxu0 %v362
    %457 = vmatprep.subr.bf16.mxu0 0
    %458 = vmatpush1.bf16.msra.mxu0 %v363
    %459 = vmatprep.subr.bf16.mxu0 0
    %460 = vmatpush1.bf16.msra.mxu0 %v364
    %461 = vmatprep.mubr.bf16.mxu0 %v104
    %462 = vmatmul.mubr.bf16.gmra.mrb[0].mxu0 %v103
    %v463 = vpop.f32.mrb[0].mxu0
    %v464 = vadd.f32 %v188, %v463
    %v465 = vpop.f32.mrb[0].mxu0
    %v466 = vpop.f32.mrb[0].mxu0
    %v467 = vpop.f32.mrb[0].mxu0
    %468 = vdwg.mxu0
    %469 = vmatprep.subr.bf16.mxu0 0
    %470 = vmatpush1.bf16.msra.mxu0 %v365
    %471 = vmatprep.subr.bf16.mxu0 0
    %472 = vmatpush1.bf16.msra.mxu0 %v366
    %473 = vmatprep.subr.bf16.mxu0 0
    %474 = vmatpush1.bf16.msra.mxu0 %v367
    %475 = vmatprep.subr.bf16.mxu0 0
    %476 = vmatpush1.bf16.msra.mxu0 %v368
    %477 = vmatprep.subr.bf16.mxu0 0
    %478 = vmatpush1.bf16.msra.mxu0 %v369
    %479 = vmatprep.subr.bf16.mxu0 0
    %480 = vmatpush1.bf16.msra.mxu0 %v370
    %481 = vmatprep.subr.bf16.mxu0 0
    %482 = vmatpush1.bf16.msra.mxu0 %v371
    %483 = vmatprep.subr.bf16.mxu0 0
    %484 = vmatpush1.bf16.msra.mxu0 %v372
    %485 = vmatprep.subr.bf16.mxu0 0
    %486 = vmatpush1.bf16.msra.mxu0 %v373
    %487 = vmatprep.subr.bf16.mxu0 0
    %488 = vmatpush1.bf16.msra.mxu0 %v374
    %489 = vmatprep.subr.bf16.mxu0 0
    %490 = vmatpush1.bf16.msra.mxu0 %v375
    %491 = vmatprep.subr.bf16.mxu0 0
    %492 = vmatpush1.bf16.msra.mxu0 %v376
    %493 = vmatprep.subr.bf16.mxu0 0
    %494 = vmatpush1.bf16.msra.mxu0 %v377
    %495 = vmatprep.subr.bf16.mxu0 0
    %496 = vmatpush1.bf16.msra.mxu0 %v378
    %497 = vmatprep.subr.bf16.mxu0 0
    %498 = vmatpush1.bf16.msra.mxu0 %v379
    %499 = vmatprep.subr.bf16.mxu0 0
    %500 = vmatpush1.bf16.msra.mxu0 %v380
    %501 = vmatprep.mubr.bf16.mxu0 %v106
    %502 = vmatmul.mubr.bf16.gmra.mrb[0].mxu0 %v105
    %v503 = vpop.f32.mrb[0].mxu0
    %v504 = vadd.f32 %v464, %v503
    %v505 = vpop.f32.mrb[0].mxu0
    %v506 = vpop.f32.mrb[0].mxu0
    %v507 = vpop.f32.mrb[0].mxu0
    %508 = vdwg.mxu0
    %509 = vmatprep.subr.bf16.mxu0 0
    %510 = vmatpush1.bf16.msra.mxu0 %v381
    %511 = vmatprep.subr.bf16.mxu0 0
    %512 = vmatpush1.bf16.msra.mxu0 %v382
    %513 = vmatprep.subr.bf16.mxu0 0
    %514 = vmatpush1.bf16.msra.mxu0 %v383
    %515 = vmatprep.subr.bf16.mxu0 0
    %516 = vmatpush1.bf16.msra.mxu0 %v384
    %517 = vmatprep.subr.bf16.mxu0 0
    %518 = vmatpush1.bf16.msra.mxu0 %v385
    %519 = vmatprep.subr.bf16.mxu0 0
    %520 = vmatpush1.bf16.msra.mxu0 %v386
    %521 = vmatprep.subr.bf16.mxu0 0
    %522 = vmatpush1.bf16.msra.mxu0 %v387
    %523 = vmatprep.subr.bf16.mxu0 0
    %524 = vmatpush1.bf16.msra.mxu0 %v388
    %525 = vmatprep.subr.bf16.mxu0 0
    %526 = vmatpush1.bf16.msra.mxu0 0
    %527 = vmatprep.subr.bf16.mxu0 0
    %528 = vmatpush1.bf16.msra.mxu0 0
    %529 = vmatprep.subr.bf16.mxu0 0
    %530 = vmatpush1.bf16.msra.mxu0 0
    %531 = vmatprep.subr.bf16.mxu0 0
    %532 = vmatpush1.bf16.msra.mxu0 0
    %533 = vmatprep.subr.bf16.mxu0 0
    %534 = vmatpush1.bf16.msra.mxu0 0
    %535 = vmatprep.subr.bf16.mxu0 0
    %536 = vmatpush1.bf16.msra.mxu0 0
    %537 = vmatprep.subr.bf16.mxu0 0
    %538 = vmatpush1.bf16.msra.mxu0 0
    %539 = vmatprep.subr.bf16.mxu0 0
    %540 = vmatpush1.bf16.msra.mxu0 0
    %541 = vmatprep.mubr.bf16.mxu0 0
    %542 = vmatmul.mubr.bf16.gmra.mrb[0].mxu0 %v107
    %v543 = vpop.f32.mrb[0].mxu0
    %v544 = vadd.f32 %v504, %v543
    %v545 = vpop.f32.mrb[0].mxu0
    %v546 = vpop.f32.mrb[0].mxu0
    %v547 = vpop.f32.mrb[0].mxu0
    %548 = vdwg.mxu0
    %v549 = vld [vmem:[#allocation5] sm:$0xff]
    %v550 = vld [vmem:[#allocation5 + $0x8] sm:$0xff]
    %v551 = vld [vmem:[#allocation5 + $0x10] sm:$0xff]
    %v552 = vld [vmem:[#allocation5 + $0x18] sm:$0xff]
    %v553 = vpack.c.bf16 %v551, %v549
    %v554 = vpack.c.bf16 %v552, %v550
    %v555 = vld [vmem:[#allocation7] sm:$0xf]
    %v556 = vld [vmem:[#allocation7 + $0x4] sm:$0xf]
    %v557 = vld [vmem:[#allocation7 + $0x8] sm:$0xf]
    %v558 = vld [vmem:[#allocation7 + $0xc] sm:$0xf]
    %v559 = vld [vmem:[#allocation7 + $0x10] sm:$0xf]
    %v560 = vld [vmem:[#allocation7 + $0x14] sm:$0xf]
    %v561 = vld [vmem:[#allocation7 + $0x18] sm:$0xf]
    %v562 = vld [vmem:[#allocation7 + $0x1c] sm:$0xf]
    %v563 = vld [vmem:[#allocation7 + $0x20] sm:$0xf]
    %v564 = vld [vmem:[#allocation7 + $0x24] sm:$0xf]
    %v565 = vld [vmem:[#allocation7 + $0x28] sm:$0xf]
    %v566 = vld [vmem:[#allocation7 + $0x2c] sm:$0xf]
    %v567 = vld [vmem:[#allocation7 + $0x30] sm:$0xf]
    %v568 = vld [vmem:[#allocation7 + $0x34] sm:$0xf]
    %v569 = vld [vmem:[#allocation7 + $0x38] sm:$0xf]
    %v570 = vld [vmem:[#allocation7 + $0x3c] sm:$0xf]
    %v571 = vld [vmem:[#allocation7 + $0x40] sm:$0xf]
    %v572 = vld [vmem:[#allocation7 + $0x44] sm:$0xf]
    %v573 = vld [vmem:[#allocation7 + $0x48] sm:$0xf]
    %v574 = vld [vmem:[#allocation7 + $0x4c] sm:$0xf]
    %v575 = vld [vmem:[#allocation7 + $0x50] sm:$0xf]
    %v576 = vld [vmem:[#allocation7 + $0x54] sm:$0xf]
    %v577 = vld [vmem:[#allocation7 + $0x58] sm:$0xf]
    %v578 = vld [vmem:[#allocation7 + $0x5c] sm:$0xf]
    %v579 = vld [vmem:[#allocation7 + $0x60] sm:$0xf]
    %v580 = vld [vmem:[#allocation7 + $0x64] sm:$0xf]
    %v581 = vld [vmem:[#allocation7 + $0x68] sm:$0xf]
    %v582 = vld [vmem:[#allocation7 + $0x6c] sm:$0xf]
    %v583 = vld [vmem:[#allocation7 + $0x70] sm:$0xf]
    %v584 = vld [vmem:[#allocation7 + $0x74] sm:$0xf]
    %v585 = vld [vmem:[#allocation7 + $0x78] sm:$0xf]
    %v586 = vld [vmem:[#allocation7 + $0x7c] sm:$0xf]
    %v587 = vlaneseq
    %v588 = vshrl.u32 %v587, 7
    %v589 = vsub.s32 0, %v588
    %v590 = vrot.slane %v544, %v589
    %v623 = vunpack.c.l.b16 %v555
    %v624 = vunpack.c.l.b16 %v556
    %v625 = vunpack.c.l.b16 %v557
    %v626 = vunpack.c.l.b16 %v558
    %v627 = vunpack.c.l.b16 %v559
    %v628 = vunpack.c.l.b16 %v560
    %v629 = vunpack.c.l.b16 %v561
    %v630 = vunpack.c.l.b16 %v562
    %v631 = vunpack.c.l.b16 %v563
    %v632 = vunpack.c.l.b16 %v564
    %v633 = vunpack.c.l.b16 %v565
    %v634 = vunpack.c.l.b16 %v566
    %v635 = vunpack.c.l.b16 %v567
    %v636 = vunpack.c.l.b16 %v568
    %v637 = vunpack.c.l.b16 %v569
    %v638 = vunpack.c.l.b16 %v570
    %v639 = vunpack.c.l.b16 %v571
    %v640 = vunpack.c.l.b16 %v572
    %v641 = vunpack.c.l.b16 %v573
    %v642 = vunpack.c.l.b16 %v574
    %v643 = vunpack.c.l.b16 %v575
    %v644 = vunpack.c.l.b16 %v576
    %v645 = vunpack.c.l.b16 %v577
    %v646 = vunpack.c.l.b16 %v578
    %v647 = vunpack.c.l.b16 %v579
    %v648 = vunpack.c.l.b16 %v580
    %v649 = vunpack.c.l.b16 %v581
    %v650 = vunpack.c.l.b16 %v582
    %v651 = vunpack.c.l.b16 %v583
    %v652 = vunpack.c.l.b16 %v584
    %v653 = vunpack.c.l.b16 %v585
    %v654 = vunpack.c.l.b16 %v586
    %v655 = vpack.c.b16 %v624, %v623
    %v656 = vpack.c.b16 %v626, %v625
    %v657 = vpack.c.b16 %v628, %v627
    %v658 = vpack.c.b16 %v630, %v629
    %v659 = vpack.c.b16 %v632, %v631
    %v660 = vpack.c.b16 %v634, %v633
    %v661 = vpack.c.b16 %v636, %v635
    %v662 = vpack.c.b16 %v638, %v637
    %v663 = vpack.c.b16 %v640, %v639
    %v664 = vpack.c.b16 %v642, %v641
    %v665 = vpack.c.b16 %v644, %v643
    %v666 = vpack.c.b16 %v646, %v645
    %v667 = vpack.c.b16 %v648, %v647
    %v668 = vpack.c.b16 %v650, %v649
    %v669 = vpack.c.b16 %v652, %v651
    %v670 = vpack.c.b16 %v654, %v653
    %687 = vmatprep.subr.bf16.mxu0 0
    %688 = vmatpush1.bf16.msra.mxu0 %v655
    %689 = vmatprep.subr.bf16.mxu0 0
    %690 = vmatpush1.bf16.msra.mxu0 %v656
    %691 = vmatprep.subr.bf16.mxu0 0
    %692 = vmatpush1.bf16.msra.mxu0 %v657
    %693 = vmatprep.subr.bf16.mxu0 0
    %694 = vmatpush1.bf16.msra.mxu0 %v658
    %695 = vmatprep.subr.bf16.mxu0 0
    %696 = vmatpush1.bf16.msra.mxu0 %v659
    %697 = vmatprep.subr.bf16.mxu0 0
    %698 = vmatpush1.bf16.msra.mxu0 %v660
    %699 = vmatprep.subr.bf16.mxu0 0
    %700 = vmatpush1.bf16.msra.mxu0 %v661
    %701 = vmatprep.subr.bf16.mxu0 0
    %702 = vmatpush1.bf16.msra.mxu0 %v662
    %703 = vmatprep.subr.bf16.mxu0 0
    %704 = vmatpush1.bf16.msra.mxu0 %v663
    %705 = vmatprep.subr.bf16.mxu0 0
    %706 = vmatpush1.bf16.msra.mxu0 %v664
    %707 = vmatprep.subr.bf16.mxu0 0
    %708 = vmatpush1.bf16.msra.mxu0 %v665
    %709 = vmatprep.subr.bf16.mxu0 0
    %710 = vmatpush1.bf16.msra.mxu0 %v666
    %711 = vmatprep.subr.bf16.mxu0 0
    %712 = vmatpush1.bf16.msra.mxu0 %v667
    %713 = vmatprep.subr.bf16.mxu0 0
    %714 = vmatpush1.bf16.msra.mxu0 %v668
    %715 = vmatprep.subr.bf16.mxu0 0
    %716 = vmatpush1.bf16.msra.mxu0 %v669
    %717 = vmatprep.subr.bf16.mxu0 0
    %718 = vmatpush1.bf16.msra.mxu0 %v670
    %719 = vmatprep.mubr.bf16.mxu0 %v554
    %720 = vmatmul.mubr.bf16.gmra.mrb[0].mxu0 %v553
    %v721 = vpop.f32.mrb[0].mxu0
    %v722 = vadd.f32 %v590, %v721
    %v723 = vpop.f32.mrb[0].mxu0
    %v724 = vpop.f32.mrb[0].mxu0
    %v725 = vadd.f32 %v590, %v724
    %v726 = vpop.f32.mrb[0].mxu0
    %727 = vdwg.mxu0
    %728 = vst [vmem:[#allocation10] sm:$0xff] %v722
    %729 = vst [vmem:[#allocation10 + $0x8] sm:$0xff] %v725
    // Predicated region
    $region38: #{tpu_custom_call.1} parent=1 // pred_check
      _
    $region39: #{tpu_custom_call.1} parent=1 // pred_check_branch
      %731 = sbr.rel (0) target = $region41
    $region40: #{tpu_custom_call.1} parent=1 // pred_region
      %s733 = ssub.s32 256, 256
      %734 = vsyncadd [#allocation4], %s733
      %s735 = sshll.u32 [#allocation10], 4
      %s736 = int_to_ptr.vmem [resolvable:$true] %s735
      %741 = dma.vmem_to_hbm [thread:$0]  %s736, 256, %s5, [#allocation4], 128, 128, 8
    $region41: #{tpu_custom_call.1} parent=1 // pred_fallthru
      _
    // Predicated region
    $region42: #{tpu_custom_call.1} parent=1 // pred_check
      _
    $region43: #{tpu_custom_call.1} parent=1 // pred_check_branch
      %743 = sbr.rel (0) target = $region45
    $region44: #{tpu_custom_call.1} parent=1 // pred_region
      %744 = dma.done [#allocation4], 256
    $region45: #{tpu_custom_call.1} parent=1 // pred_fallthru
      _
    %745 = vsyncpa [#allocation3], 1
    %746 = vsyncpa [#allocation6], 1
    %747 = vsyncpa [#allocation9], 1
    %748 = vsyncpa [#allocation4], 1

</llo_original>
